<compile_context>
chip_gen: v7x
topology: tpu7x:2x2x1
jax: 0.10.0
libtpu: 0.0.40
codegen_flags: <defaults>
</compile_context>

<pallas_src>
import jax
import jax.numpy as jnp
from jax.experimental import pallas as pl
from jax.experimental.pallas import tpu as pltpu

D_IN, H1, H2, D_OUT = 28 * 28, 256, 128, 10
D_OUT_PAD = 128        # lane-dense output width (first 10 columns are the logits)


def _round_up(n, m):
    return ((n + m - 1) // m) * m


def _mlp_kernel(x_ref, w1_ref, b1_ref, w2_ref, b2_ref, w3_ref, b3_ref, o_ref):
    # f32 -> bf16 cast happens here (VPU work, hidden under MXU/DMA slots).
    x = x_ref[...].astype(jnp.bfloat16)
    # fc1 + ReLU   (bf16 operands, f32 accumulate / bias / ReLU)
    h1 = jnp.dot(x, w1_ref[...], preferred_element_type=jnp.float32)
    h1 = jnp.maximum(h1 + b1_ref[...], 0.0).astype(jnp.bfloat16)
    # fc2 + ReLU
    h2 = jnp.dot(h1, w2_ref[...], preferred_element_type=jnp.float32)
    h2 = jnp.maximum(h2 + b2_ref[...], 0.0).astype(jnp.bfloat16)
    # fc3 (logits, no activation) -> lane-dense (block_b, 128) store
    o_ref[...] = (jnp.dot(h2, w3_ref[...], preferred_element_type=jnp.float32)
                  + b3_ref[...]).astype(o_ref.dtype)


def prepare_params(params):
    """One-time pad/cast of the weights (hoisted out of the per-call path)."""
    w1, b1, w2, b2, w3, b3 = params                        # f32, (in, out) layout
    w1b = w1.astype(jnp.bfloat16)                          # (784, 256)
    w2b = w2.astype(jnp.bfloat16)                          # (256, 128)
    w3p = jnp.pad(w3.astype(jnp.bfloat16),
                  ((0, 0), (0, D_OUT_PAD - D_OUT)))        # (128, 128)
    b3p = jnp.pad(b3, ((0, 0), (0, D_OUT_PAD - D_OUT)))    # (1, 128) f32
    return (w1b, b1, w2b, b2, w3p, b3p)


def deepnet_forward(x, prepared_params, *, block_b=1024):
    """x: (B, 1, 28, 28) or (B, 784) float32 -> (B, 10) float32 logits."""
    w1b, b1, w2b, b2, w3p, b3p = prepared_params
    x2d = x.reshape(-1, D_IN).astype(jnp.float32)          # same as torch .view
    B = x2d.shape[0]

    # --- pick batch tile (multiple of 8). Only force a >=2-step grid (for the
    #     two v7x TensorCores) when the batch is big enough that each tile
    #     keeps >= 256 rows; small batches stay in a single tile.
    if B >= 512:
        target = _round_up(pl.cdiv(B, 2), 8)
    else:
        target = _round_up(B, 8)
    bb = max(8, min(_round_up(block_b, 8), target))
    grid_b = pl.cdiv(B, bb)
    B_pad = grid_b * bb

    # Only a cheap batch pad for ragged batches (no dtype change, no K pad).
    if B_pad != B:
        x2d = jnp.pad(x2d, ((0, B_pad - B), (0, 0)))

    full = lambda i: (0, 0)                                # weights/biases resident

    flops = 2 * B_pad * (D_IN * H1 + H1 * H2 + H2 * D_OUT_PAD)
    bytes_accessed = (B_pad * D_IN * 4                     # x (f32 in)
                      + w1b.size * 2 + w2b.size * 2 + w3p.size * 2
                      + b1.size * 4 + b2.size * 4 + b3p.size * 4
                      + B_pad * D_OUT_PAD * 4)             # out (f32)
    cost = pl.CostEstimate(flops=flops, transcendentals=0,
                           bytes_accessed=bytes_accessed)

    out_padded = pl.pallas_call(
        _mlp_kernel,
        out_shape=jax.ShapeDtypeStruct((B_pad, D_OUT_PAD), jnp.float32),
        grid_spec=pltpu.PrefetchScalarGridSpec(
            num_scalar_prefetch=0,
            grid=(grid_b,),
            in_specs=[
                pl.BlockSpec((bb, D_IN), lambda i: (i, 0)),   # x tile (f32)
                pl.BlockSpec((D_IN, H1), full),               # W1 (bf16)
                pl.BlockSpec((1, H1), full),                  # b1 (f32)
                pl.BlockSpec((H1, H2), full),                 # W2 (bf16)
                pl.BlockSpec((1, H2), full),                  # b2 (f32)
                pl.BlockSpec((H2, D_OUT_PAD), full),          # W3 (bf16, col-padded)
                pl.BlockSpec((1, D_OUT_PAD), full),           # b3 (f32, col-padded)
            ],
            out_specs=pl.BlockSpec((bb, D_OUT_PAD), lambda i: (i, 0)),
        ),
        compiler_params=pltpu.CompilerParams(
            dimension_semantics=("parallel",),
            vmem_limit_bytes=48 << 20),
        cost_estimate=cost,
    )(x2d, w1b, b1, w2b, b2, w3p, b3p)

    # Slice off batch/lane padding; fuses with the kernel under the caller's jit.
    return out_padded[:B, :D_OUT]


def init_params(key):
    """Deterministic torch-like init; weights stored as (in, out) = torch weight.T."""
    k1, k2, k3, k4, k5, k6 = jax.random.split(key, 6)

    def uniform(k, shape, fan_in):
        bound = 1.0 / jnp.sqrt(fan_in)
        return jax.random.uniform(k, shape, jnp.float32, -bound, bound)

    w1 = uniform(k1, (D_IN, H1), D_IN)
    b1 = uniform(k2, (1, H1), D_IN)
    w2 = uniform(k3, (H1, H2), H1)
    b2 = uniform(k4, (1, H2), H1)
    w3 = uniform(k5, (H2, D_OUT), H2)
    b3 = uniform(k6, (1, D_OUT), H2)
    return (w1, b1, w2, b2, w3, b3)


def _reference(x, params):
    w1, b1, w2, b2, w3, b3 = params
    x2d = x.reshape(-1, D_IN)
    h1 = jnp.maximum(x2d @ w1 + b1, 0.0)
    h2 = jnp.maximum(h1 @ w2 + b2, 0.0)
    return h2 @ w3 + b3


if __name__ == "__main__":
    key = jax.random.PRNGKey(0)
    kx, kx2, kp = jax.random.split(key, 3)
    params = init_params(kp)
    prepared = prepare_params(params)

    # jit the whole wrapper so the final [:B, :10] slice fuses with the kernel.
    fwd = jax.jit(lambda xin: deepnet_forward(xin, prepared))

    # small, even batch (single tile)
    B = 16
    x = jax.random.normal(kx, (B, 1, 28, 28), jnp.float32)   # NCHW, like MNIST
    out = jax.block_until_ready(fwd(x))
    ref = _reference(x, params)
    assert out.shape == (B, D_OUT)
    assert jnp.allclose(out, ref, atol=2e-2, rtol=2e-2), "mismatch vs reference (B=16)"

    # ragged batch (exercises the batch-padding path)
    B2 = 20
    x2 = jax.random.normal(kx2, (B2, 1, 28, 28), jnp.float32)
    out2 = jax.block_until_ready(fwd(x2))
    ref2 = _reference(x2, params)
    assert out2.shape == (B2, D_OUT)
    assert jnp.allclose(out2, ref2, atol=2e-2, rtol=2e-2), "mismatch vs reference (B=20)"

    print("KERNEL_OK")
</pallas_src>

<mosaic_0001>
module attributes {stable_mosaic.version = 11 : i64} {
  func.func @_mlp_kernel(%arg0: i32, %arg1: memref<16x784xf32, #tpu.memory_space<vmem>>, %arg2: memref<784x256xbf16, #tpu.memory_space<vmem>>, %arg3: memref<1x256xf32, #tpu.memory_space<vmem>>, %arg4: memref<256x128xbf16, #tpu.memory_space<vmem>>, %arg5: memref<1x128xf32, #tpu.memory_space<vmem>>, %arg6: memref<128x128xbf16, #tpu.memory_space<vmem>>, %arg7: memref<1x128xf32, #tpu.memory_space<vmem>>, %arg8: memref<16x128xf32, #tpu.memory_space<vmem>>) attributes {dimension_semantics = [#tpu.dimension_semantics<parallel>], iteration_bounds = array<i64: 1>, scalar_prefetch = 0 : i64, scratch_operands = 0 : i64, tpu.core_type = #tpu.core_type<tc>, window_params = [{transform_indices = @transform_0, window_bounds = array<i64: 16, 784>}, {pipeline_mode = #tpu.pipeline_mode<synchronous>, transform_indices = @transform_1, window_bounds = array<i64: 784, 256>}, {pipeline_mode = #tpu.pipeline_mode<synchronous>, transform_indices = @transform_2, window_bounds = array<i64: 1, 256>}, {pipeline_mode = #tpu.pipeline_mode<synchronous>, transform_indices = @transform_3, window_bounds = array<i64: 256, 128>}, {pipeline_mode = #tpu.pipeline_mode<synchronous>, transform_indices = @transform_4, window_bounds = array<i64: 1, 128>}, {pipeline_mode = #tpu.pipeline_mode<synchronous>, transform_indices = @transform_5, window_bounds = array<i64: 128, 128>}, {pipeline_mode = #tpu.pipeline_mode<synchronous>, transform_indices = @transform_6, window_bounds = array<i64: 1, 128>}, {transform_indices = @transform_7, window_bounds = array<i64: 16, 128>}]} {
    %c0 = arith.constant 0 : index
    %c0_0 = arith.constant 0 : index
    %0 = vector.load %arg1[%c0, %c0_0] : memref<16x784xf32, #tpu.memory_space<vmem>>, vector<16x784xf32>
    %1 = arith.truncf %0 : vector<16x784xf32> to vector<16x784xbf16>
    %c0_1 = arith.constant 0 : index
    %c0_2 = arith.constant 0 : index
    %2 = vector.load %arg2[%c0_1, %c0_2] : memref<784x256xbf16, #tpu.memory_space<vmem>>, vector<784x256xbf16>
    %cst = arith.constant dense<0.000000e+00> : vector<16x256xf32>
    %3 = tpu.matmul %1, %2, %cst {dimension_numbers = #tpu.dot_dimension_numbers<[1], [0], [0], [1], [0, 0, 1, 1], [], []>} : vector<16x784xbf16>, vector<784x256xbf16>, vector<16x256xf32> -> vector<16x256xf32>
    %c0_3 = arith.constant 0 : index
    %c0_4 = arith.constant 0 : index
    %4 = vector.load %arg3[%c0_3, %c0_4] : memref<1x256xf32, #tpu.memory_space<vmem>>, vector<1x256xf32>
    %5 = vector.broadcast %4 : vector<1x256xf32> to vector<16x256xf32>
    %6 = arith.addf %3, %5 : vector<16x256xf32>
    %cst_5 = arith.constant 0.000000e+00 : f32
    %7 = vector.broadcast %cst_5 : f32 to vector<16x256xf32>
    %8 = arith.maximumf %6, %7 : vector<16x256xf32>
    %9 = arith.truncf %8 : vector<16x256xf32> to vector<16x256xbf16>
    %c0_6 = arith.constant 0 : index
    %c0_7 = arith.constant 0 : index
    %10 = vector.load %arg4[%c0_6, %c0_7] : memref<256x128xbf16, #tpu.memory_space<vmem>>, vector<256x128xbf16>
    %cst_8 = arith.constant dense<0.000000e+00> : vector<16x128xf32>
    %11 = tpu.matmul %9, %10, %cst_8 {dimension_numbers = #tpu.dot_dimension_numbers<[1], [0], [0], [1], [0, 0, 1, 1], [], []>} : vector<16x256xbf16>, vector<256x128xbf16>, vector<16x128xf32> -> vector<16x128xf32>
    %c0_9 = arith.constant 0 : index
    %c0_10 = arith.constant 0 : index
    %12 = vector.load %arg5[%c0_9, %c0_10] : memref<1x128xf32, #tpu.memory_space<vmem>>, vector<1x128xf32>
    %13 = vector.broadcast %12 : vector<1x128xf32> to vector<16x128xf32>
    %14 = arith.addf %11, %13 : vector<16x128xf32>
    %cst_11 = arith.constant 0.000000e+00 : f32
    %15 = vector.broadcast %cst_11 : f32 to vector<16x128xf32>
    %16 = arith.maximumf %14, %15 : vector<16x128xf32>
    %17 = arith.truncf %16 : vector<16x128xf32> to vector<16x128xbf16>
    %c0_12 = arith.constant 0 : index
    %c0_13 = arith.constant 0 : index
    %18 = vector.load %arg6[%c0_12, %c0_13] : memref<128x128xbf16, #tpu.memory_space<vmem>>, vector<128x128xbf16>
    %cst_14 = arith.constant dense<0.000000e+00> : vector<16x128xf32>
    %19 = tpu.matmul %17, %18, %cst_14 {dimension_numbers = #tpu.dot_dimension_numbers<[1], [0], [0], [1], [0, 0, 1, 1], [], []>} : vector<16x128xbf16>, vector<128x128xbf16>, vector<16x128xf32> -> vector<16x128xf32>
    %c0_15 = arith.constant 0 : index
    %c0_16 = arith.constant 0 : index
    %20 = vector.load %arg7[%c0_15, %c0_16] : memref<1x128xf32, #tpu.memory_space<vmem>>, vector<1x128xf32>
    %21 = vector.broadcast %20 : vector<1x128xf32> to vector<16x128xf32>
    %22 = arith.addf %19, %21 : vector<16x128xf32>
    %c0_17 = arith.constant 0 : index
    %c0_18 = arith.constant 0 : index
    %23 = vector.load %arg8[%c0_17, %c0_18] : memref<16x128xf32, #tpu.memory_space<vmem>>, vector<16x128xf32>
    tpu.vector_store %arg8[%c0_17, %c0_18], %22 {strides = array<i32>} : memref<16x128xf32, #tpu.memory_space<vmem>>, vector<16x128xf32>,
    return
  }
  func.func @transform_0(%arg0: i32) -> (i32, i32) {
    %c0_i32 = arith.constant 0 : i32
    %c0_i32_0 = arith.constant 0 : i32
    return %arg0, %c0_i32 : i32, i32
  }
  func.func @transform_1(%arg0: i32) -> (i32, i32) {
    %c0_i32 = arith.constant 0 : i32
    %c0_i32_0 = arith.constant 0 : i32
    %c0_i32_1 = arith.constant 0 : i32
    return %c0_i32, %c0_i32_0 : i32, i32
  }
  func.func @transform_2(%arg0: i32) -> (i32, i32) {
    %c0_i32 = arith.constant 0 : i32
    %c0_i32_0 = arith.constant 0 : i32
    %c0_i32_1 = arith.constant 0 : i32
    return %c0_i32, %c0_i32_0 : i32, i32
  }
  func.func @transform_3(%arg0: i32) -> (i32, i32) {
    %c0_i32 = arith.constant 0 : i32
    %c0_i32_0 = arith.constant 0 : i32
    %c0_i32_1 = arith.constant 0 : i32
    return %c0_i32, %c0_i32_0 : i32, i32
  }
  func.func @transform_4(%arg0: i32) -> (i32, i32) {
    %c0_i32 = arith.constant 0 : i32
    %c0_i32_0 = arith.constant 0 : i32
    %c0_i32_1 = arith.constant 0 : i32
    return %c0_i32, %c0_i32_0 : i32, i32
  }
  func.func @transform_5(%arg0: i32) -> (i32, i32) {
    %c0_i32 = arith.constant 0 : i32
    %c0_i32_0 = arith.constant 0 : i32
    %c0_i32_1 = arith.constant 0 : i32
    return %c0_i32, %c0_i32_0 : i32, i32
  }
  func.func @transform_6(%arg0: i32) -> (i32, i32) {
    %c0_i32 = arith.constant 0 : i32
    %c0_i32_0 = arith.constant 0 : i32
    %c0_i32_1 = arith.constant 0 : i32
    return %c0_i32, %c0_i32_0 : i32, i32
  }
  func.func @transform_7(%arg0: i32) -> (i32, i32) {
    %c0_i32 = arith.constant 0 : i32
    %c0_i32_0 = arith.constant 0 : i32
    return %arg0, %c0_i32 : i32, i32
  }
}

</mosaic_0001>

<llo_original>
// kernel: _lambda_.1
$region0: #{_lambda_.1}
  #allocation0 [shape = 'u32[]', space=smem, size = 0x4, offset = 0x4, fixed_abs, tag = 'smem constant byte address 0x4 - core index']
  #allocation1 [shape = 'u32[144,128]{1,0:T(1,128)}', space=vmem, size = 0x12000, scoped, tag = 'internal scratch']
  %s0 = inlined_call_operand.vmem [shape: f32[16,784], index: 0, kind: input, shape index: {}]
  %s1 = inlined_call_operand.vmem [shape: bf16[784,256], index: 1, kind: input, shape index: {}]
  %s2 = inlined_call_operand.vmem [shape: f32[1,256], index: 2, kind: input, shape index: {}]
  %s3 = inlined_call_operand.vmem [shape: bf16[256,128], index: 3, kind: input, shape index: {}]
  %s4 = inlined_call_operand.vmem [shape: f32[1,128], index: 4, kind: input, shape index: {}]
  %s5 = inlined_call_operand.vmem [shape: bf16[128,128], index: 5, kind: input, shape index: {}]
  %s6 = inlined_call_operand.vmem [shape: f32[1,128], index: 6, kind: input, shape index: {}]
  %s7 = inlined_call_operand.hbm [shape: f32[16,128], index: 7, kind: output, shape index: {}]
  %s8 = sld [smem:[#allocation0]]
  $region38: #{_lambda_.1} parent=0
    _
  %s10 = ssub.s32 1, %s8
  %s11 = scalar_select 0, %s10, %s8
  $region1: #{_lambda_.1} parent=0
    #allocation2 [shape = 'u8[8192]{0}', space=vmem, size = 0x2000, scoped, tag = 'output window, operand 0, single buffered']
    #allocation3 [shape = 's32[1]{0}', space=sflag, size = 0x4, scoped, tag = 'scoped memory for _lambda_.1']
    %12 = vsyncpa [#allocation3], 0
    // Predicated region
    $region2: #{_lambda_.1} parent=1 // pred_check
      _
    $region3: #{_lambda_.1} parent=1 // pred_check_branch
      %14 = sbr.rel (0) target = $region5
    $region4: #{_lambda_.1} parent=1 // pred_region
      _
    $region5: #{_lambda_.1} parent=1 // pred_fallthru
      _
    // Predicated region
    $region6: #{_lambda_.1} parent=1 // pred_check
      _
    $region7: #{_lambda_.1} parent=1 // pred_check_branch
      %16 = sbr.rel (0) target = $region9
    $region8: #{_lambda_.1} parent=1 // pred_region
      _
    $region9: #{_lambda_.1} parent=1 // pred_fallthru
      _
    // Predicated region
    $region10: #{_lambda_.1} parent=1 // pred_check
      _
    $region11: #{_lambda_.1} parent=1 // pred_check_branch
      %18 = sbr.rel (0) target = $region13
    $region12: #{_lambda_.1} parent=1 // pred_region
      _
    $region13: #{_lambda_.1} parent=1 // pred_fallthru
      _
    // Predicated region
    $region14: #{_lambda_.1} parent=1 // pred_check
      _
    $region15: #{_lambda_.1} parent=1 // pred_check_branch
      %20 = sbr.rel (0) target = $region17
    $region16: #{_lambda_.1} parent=1 // pred_region
      _
    $region17: #{_lambda_.1} parent=1 // pred_fallthru
      _
    // Predicated region
    $region18: #{_lambda_.1} parent=1 // pred_check
      _
    $region19: #{_lambda_.1} parent=1 // pred_check_branch
      %22 = sbr.rel (0) target = $region21
    $region20: #{_lambda_.1} parent=1 // pred_region
      _
    $region21: #{_lambda_.1} parent=1 // pred_fallthru
      _
    // Predicated region
    $region22: #{_lambda_.1} parent=1 // pred_check
      _
    $region23: #{_lambda_.1} parent=1 // pred_check_branch
      %24 = sbr.rel (0) target = $region25
    $region24: #{_lambda_.1} parent=1 // pred_region
      _
    $region25: #{_lambda_.1} parent=1 // pred_fallthru
      _
    // Predicated region
    $region26: #{_lambda_.1} parent=1 // pred_check
      _
    $region27: #{_lambda_.1} parent=1 // pred_check_branch
      %26 = sbr.rel (0) target = $region29
    $region28: #{_lambda_.1} parent=1 // pred_region
      _
    $region29: #{_lambda_.1} parent=1 // pred_fallthru
      _
    %v28 = vld [vmem:[%s0] sm:$0xff]
    %v29 = vld [vmem:[%s0 + $0x8] sm:$0xff]
    %v30 = vld [vmem:[%s0 + $0x10] sm:$0xff]
    %v31 = vld [vmem:[%s0 + $0x18] sm:$0xff]
    %v32 = vld [vmem:[%s0 + $0x20] sm:$0xff]
    %v33 = vld [vmem:[%s0 + $0x28] sm:$0xff]
    %v34 = vld [vmem:[%s0 + $0x30] sm:$0xff]
    %v35 = vld [vmem:[%s0 + $0x38] sm:$0xff]
    %v36 = vld [vmem:[%s0 + $0x40] sm:$0xff]
    %v37 = vld [vmem:[%s0 + $0x48] sm:$0xff]
    %v38 = vld [vmem:[%s0 + $0x50] sm:$0xff]
    %v39 = vld [vmem:[%s0 + $0x58] sm:$0xff]
    %v40 = vld [vmem:[%s0 + $0x60] sm:$0xff]
    %v41 = vld [vmem:[%s0 + $0x68] sm:$0xff]
    %v42 = vpack.c.bf16 %v35, %v28
    %v43 = vpack.c.bf16 %v36, %v29
    %v44 = vpack.c.bf16 %v37, %v30
    %v45 = vpack.c.bf16 %v38, %v31
    %v46 = vpack.c.bf16 %v39, %v32
    %v47 = vpack.c.bf16 %v40, %v33
    %v48 = vpack.c.bf16 %v41, %v34
    %v49 = vld [vmem:[%s1] sm:$0xff]
    %v50 = vld [vmem:[%s1 + $0x8] sm:$0xff]
    %v51 = vld [vmem:[%s1 + $0x10] sm:$0xff]
    %v52 = vld [vmem:[%s1 + $0x18] sm:$0xff]
    %v53 = vld [vmem:[%s1 + $0x20] sm:$0xff]
    %v54 = vld [vmem:[%s1 + $0x28] sm:$0xff]
    %v55 = vld [vmem:[%s1 + $0x30] sm:$0xff]
    %v56 = vld [vmem:[%s1 + $0x38] sm:$0xff]
    %v57 = vld [vmem:[%s1 + $0x40] sm:$0xff]
    %v58 = vld [vmem:[%s1 + $0x48] sm:$0xff]
    %v59 = vld [vmem:[%s1 + $0x50] sm:$0xff]
    %v60 = vld [vmem:[%s1 + $0x58] sm:$0xff]
    %v61 = vld [vmem:[%s1 + $0x60] sm:$0xff]
    %v62 = vld [vmem:[%s1 + $0x68] sm:$0xff]
    %v63 = vld [vmem:[%s1 + $0x70] sm:$0xff]
    %v64 = vld [vmem:[%s1 + $0x78] sm:$0xff]
    %v65 = vld [vmem:[%s1 + $0x80] sm:$0xff]
    %v66 = vld [vmem:[%s1 + $0x88] sm:$0xff]
    %v67 = vld [vmem:[%s1 + $0x90] sm:$0xff]
    %v68 = vld [vmem:[%s1 + $0x98] sm:$0xff]
    %v69 = vld [vmem:[%s1 + $0xa0] sm:$0xff]
    %v70 = vld [vmem:[%s1 + $0xa8] sm:$0xff]
    %v71 = vld [vmem:[%s1 + $0xb0] sm:$0xff]
    %v72 = vld [vmem:[%s1 + $0xb8] sm:$0xff]
    %v73 = vld [vmem:[%s1 + $0xc0] sm:$0xff]
    %v74 = vld [vmem:[%s1 + $0xc8] sm:$0xff]
    %v75 = vld [vmem:[%s1 + $0xd0] sm:$0xff]
    %v76 = vld [vmem:[%s1 + $0xd8] sm:$0xff]
    %v77 = vld [vmem:[%s1 + $0xe0] sm:$0xff]
    %v78 = vld [vmem:[%s1 + $0xe8] sm:$0xff]
    %v79 = vld [vmem:[%s1 + $0xf0] sm:$0xff]
    %v80 = vld [vmem:[%s1 + $0xf8] sm:$0xff]
    %v81 = vld [vmem:[%s1 + $0x100] sm:$0xff]
    %v82 = vld [vmem:[%s1 + $0x108] sm:$0xff]
    %v83 = vld [vmem:[%s1 + $0x110] sm:$0xff]
    %v84 = vld [vmem:[%s1 + $0x118] sm:$0xff]
    %v85 = vld [vmem:[%s1 + $0x120] sm:$0xff]
    %v86 = vld [vmem:[%s1 + $0x128] sm:$0xff]
    %v87 = vld [vmem:[%s1 + $0x130] sm:$0xff]
    %v88 = vld [vmem:[%s1 + $0x138] sm:$0xff]
    %v89 = vld [vmem:[%s1 + $0x140] sm:$0xff]
    %v90 = vld [vmem:[%s1 + $0x148] sm:$0xff]
    %v91 = vld [vmem:[%s1 + $0x150] sm:$0xff]
    %v92 = vld [vmem:[%s1 + $0x158] sm:$0xff]
    %v93 = vld [vmem:[%s1 + $0x160] sm:$0xff]
    %v94 = vld [vmem:[%s1 + $0x168] sm:$0xff]
    %v95 = vld [vmem:[%s1 + $0x170] sm:$0xff]
    %v96 = vld [vmem:[%s1 + $0x178] sm:$0xff]
    %v97 = vld [vmem:[%s1 + $0x180] sm:$0xff]
    %v98 = vld [vmem:[%s1 + $0x188] sm:$0xff]
    %v99 = vld [vmem:[%s1 + $0x190] sm:$0xff]
    %v100 = vld [vmem:[%s1 + $0x198] sm:$0xff]
    %v101 = vld [vmem:[%s1 + $0x1a0] sm:$0xff]
    %v102 = vld [vmem:[%s1 + $0x1a8] sm:$0xff]
    %v103 = vld [vmem:[%s1 + $0x1b0] sm:$0xff]
    %v104 = vld [vmem:[%s1 + $0x1b8] sm:$0xff]
    %v105 = vld [vmem:[%s1 + $0x1c0] sm:$0xff]
    %v106 = vld [vmem:[%s1 + $0x1c8] sm:$0xff]
    %v107 = vld [vmem:[%s1 + $0x1d0] sm:$0xff]
    %v108 = vld [vmem:[%s1 + $0x1d8] sm:$0xff]
    %v109 = vld [vmem:[%s1 + $0x1e0] sm:$0xff]
    %v110 = vld [vmem:[%s1 + $0x1e8] sm:$0xff]
    %v111 = vld [vmem:[%s1 + $0x1f0] sm:$0xff]
    %v112 = vld [vmem:[%s1 + $0x1f8] sm:$0xff]
    %v113 = vld [vmem:[%s1 + $0x200] sm:$0xff]
    %v114 = vld [vmem:[%s1 + $0x208] sm:$0xff]
    %v115 = vld [vmem:[%s1 + $0x210] sm:$0xff]
    %v116 = vld [vmem:[%s1 + $0x218] sm:$0xff]
    %v117 = vld [vmem:[%s1 + $0x220] sm:$0xff]
    %v118 = vld [vmem:[%s1 + $0x228] sm:$0xff]
    %v119 = vld [vmem:[%s1 + $0x230] sm:$0xff]
    %v120 = vld [vmem:[%s1 + $0x238] sm:$0xff]
    %v121 = vld [vmem:[%s1 + $0x240] sm:$0xff]
    %v122 = vld [vmem:[%s1 + $0x248] sm:$0xff]
    %v123 = vld [vmem:[%s1 + $0x250] sm:$0xff]
    %v124 = vld [vmem:[%s1 + $0x258] sm:$0xff]
    %v125 = vld [vmem:[%s1 + $0x260] sm:$0xff]
    %v126 = vld [vmem:[%s1 + $0x268] sm:$0xff]
    %v127 = vld [vmem:[%s1 + $0x270] sm:$0xff]
    %v128 = vld [vmem:[%s1 + $0x278] sm:$0xff]
    %v129 = vld [vmem:[%s1 + $0x280] sm:$0xff]
    %v130 = vld [vmem:[%s1 + $0x288] sm:$0xff]
    %v131 = vld [vmem:[%s1 + $0x290] sm:$0xff]
    %v132 = vld [vmem:[%s1 + $0x298] sm:$0xff]
    %v133 = vld [vmem:[%s1 + $0x2a0] sm:$0xff]
    %v134 = vld [vmem:[%s1 + $0x2a8] sm:$0xff]
    %v135 = vld [vmem:[%s1 + $0x2b0] sm:$0xff]
    %v136 = vld [vmem:[%s1 + $0x2b8] sm:$0xff]
    %v137 = vld [vmem:[%s1 + $0x2c0] sm:$0xff]
    %v138 = vld [vmem:[%s1 + $0x2c8] sm:$0xff]
    %v139 = vld [vmem:[%s1 + $0x2d0] sm:$0xff]
    %v140 = vld [vmem:[%s1 + $0x2d8] sm:$0xff]
    %v141 = vld [vmem:[%s1 + $0x2e0] sm:$0xff]
    %v142 = vld [vmem:[%s1 + $0x2e8] sm:$0xff]
    %v143 = vld [vmem:[%s1 + $0x2f0] sm:$0xff]
    %v144 = vld [vmem:[%s1 + $0x2f8] sm:$0xff]
    %v145 = vld [vmem:[%s1 + $0x300] sm:$0xff]
    %v146 = vld [vmem:[%s1 + $0x308] sm:$0xff]
    %v147 = vld [vmem:[%s2] sm:$0x3]
    %v149 = vlaneseq
    %v150 = vshrl.u32 %v149, 7
    %v151 = vsub.s32 0, %v150
    %v152 = vrot.slane %v147, %v151
    %v153 = vlaneseq
    %v154 = vshrl.u32 %v153, 7
    %v155 = vsub.s32 1, %v154
    %v156 = vrot.slane %v147, %v155
    %v257 = vunpack.c.l.b16 %v49
    %v258 = vunpack.c.h.b16 %v49
    %v259 = vunpack.c.l.b16 %v50
    %v260 = vunpack.c.h.b16 %v50
    %v261 = vunpack.c.l.b16 %v51
    %v262 = vunpack.c.h.b16 %v51
    %v263 = vunpack.c.l.b16 %v52
    %v264 = vunpack.c.h.b16 %v52
    %v265 = vunpack.c.l.b16 %v53
    %v266 = vunpack.c.h.b16 %v53
    %v267 = vunpack.c.l.b16 %v54
    %v268 = vunpack.c.h.b16 %v54
    %v269 = vunpack.c.l.b16 %v55
    %v270 = vunpack.c.h.b16 %v55
    %v271 = vunpack.c.l.b16 %v56
    %v272 = vunpack.c.h.b16 %v56
    %v273 = vunpack.c.l.b16 %v57
    %v274 = vunpack.c.h.b16 %v57
    %v275 = vunpack.c.l.b16 %v58
    %v276 = vunpack.c.h.b16 %v58
    %v277 = vunpack.c.l.b16 %v59
    %v278 = vunpack.c.h.b16 %v59
    %v279 = vunpack.c.l.b16 %v60
    %v280 = vunpack.c.h.b16 %v60
    %v281 = vunpack.c.l.b16 %v61
    %v282 = vunpack.c.h.b16 %v61
    %v283 = vunpack.c.l.b16 %v62
    %v284 = vunpack.c.h.b16 %v62
    %v285 = vunpack.c.l.b16 %v63
    %v286 = vunpack.c.h.b16 %v63
    %v287 = vunpack.c.l.b16 %v64
    %v288 = vunpack.c.h.b16 %v64
    %v289 = vunpack.c.l.b16 %v65
    %v290 = vunpack.c.h.b16 %v65
    %v291 = vunpack.c.l.b16 %v66
    %v292 = vunpack.c.h.b16 %v66
    %v293 = vunpack.c.l.b16 %v67
    %v294 = vunpack.c.h.b16 %v67
    %v295 = vunpack.c.l.b16 %v68
    %v296 = vunpack.c.h.b16 %v68
    %v297 = vunpack.c.l.b16 %v69
    %v298 = vunpack.c.h.b16 %v69
    %v299 = vunpack.c.l.b16 %v70
    %v300 = vunpack.c.h.b16 %v70
    %v301 = vunpack.c.l.b16 %v71
    %v302 = vunpack.c.h.b16 %v71
    %v303 = vunpack.c.l.b16 %v72
    %v304 = vunpack.c.h.b16 %v72
    %v305 = vunpack.c.l.b16 %v73
    %v306 = vunpack.c.h.b16 %v73
    %v307 = vunpack.c.l.b16 %v74
    %v308 = vunpack.c.h.b16 %v74
    %v309 = vunpack.c.l.b16 %v75
    %v310 = vunpack.c.h.b16 %v75
    %v311 = vunpack.c.l.b16 %v76
    %v312 = vunpack.c.h.b16 %v76
    %v313 = vunpack.c.l.b16 %v77
    %v314 = vunpack.c.h.b16 %v77
    %v315 = vunpack.c.l.b16 %v78
    %v316 = vunpack.c.h.b16 %v78
    %v317 = vunpack.c.l.b16 %v79
    %v318 = vunpack.c.h.b16 %v79
    %v319 = vunpack.c.l.b16 %v80
    %v320 = vunpack.c.h.b16 %v80
    %v321 = vunpack.c.l.b16 %v81
    %v322 = vunpack.c.h.b16 %v81
    %v323 = vunpack.c.l.b16 %v82
    %v324 = vunpack.c.h.b16 %v82
    %v325 = vunpack.c.l.b16 %v83
    %v326 = vunpack.c.h.b16 %v83
    %v327 = vunpack.c.l.b16 %v84
    %v328 = vunpack.c.h.b16 %v84
    %v329 = vunpack.c.l.b16 %v85
    %v330 = vunpack.c.h.b16 %v85
    %v331 = vunpack.c.l.b16 %v86
    %v332 = vunpack.c.h.b16 %v86
    %v333 = vunpack.c.l.b16 %v87
    %v334 = vunpack.c.h.b16 %v87
    %v335 = vunpack.c.l.b16 %v88
    %v336 = vunpack.c.h.b16 %v88
    %v337 = vunpack.c.l.b16 %v89
    %v338 = vunpack.c.h.b16 %v89
    %v339 = vunpack.c.l.b16 %v90
    %v340 = vunpack.c.h.b16 %v90
    %v341 = vunpack.c.l.b16 %v91
    %v342 = vunpack.c.h.b16 %v91
    %v343 = vunpack.c.l.b16 %v92
    %v344 = vunpack.c.h.b16 %v92
    %v345 = vunpack.c.l.b16 %v93
    %v346 = vunpack.c.h.b16 %v93
    %v347 = vunpack.c.l.b16 %v94
    %v348 = vunpack.c.h.b16 %v94
    %v349 = vunpack.c.l.b16 %v95
    %v350 = vunpack.c.h.b16 %v95
    %v351 = vunpack.c.l.b16 %v96
    %v352 = vunpack.c.h.b16 %v96
    %v353 = vunpack.c.l.b16 %v97
    %v354 = vunpack.c.h.b16 %v97
    %v355 = vunpack.c.l.b16 %v98
    %v356 = vunpack.c.h.b16 %v98
    %v357 = vunpack.c.l.b16 %v99
    %v358 = vunpack.c.h.b16 %v99
    %v359 = vunpack.c.l.b16 %v100
    %v360 = vunpack.c.h.b16 %v100
    %v361 = vunpack.c.l.b16 %v101
    %v362 = vunpack.c.h.b16 %v101
    %v363 = vunpack.c.l.b16 %v102
    %v364 = vunpack.c.h.b16 %v102
    %v365 = vunpack.c.l.b16 %v103
    %v366 = vunpack.c.h.b16 %v103
    %v367 = vunpack.c.l.b16 %v104
    %v368 = vunpack.c.h.b16 %v104
    %v369 = vunpack.c.l.b16 %v105
    %v370 = vunpack.c.h.b16 %v105
    %v371 = vunpack.c.l.b16 %v106
    %v372 = vunpack.c.h.b16 %v106
    %v373 = vunpack.c.l.b16 %v107
    %v374 = vunpack.c.h.b16 %v107
    %v375 = vunpack.c.l.b16 %v108
    %v376 = vunpack.c.h.b16 %v108
    %v377 = vunpack.c.l.b16 %v109
    %v378 = vunpack.c.h.b16 %v109
    %v379 = vunpack.c.l.b16 %v110
    %v380 = vunpack.c.h.b16 %v110
    %v381 = vunpack.c.l.b16 %v111
    %v382 = vunpack.c.h.b16 %v111
    %v383 = vunpack.c.l.b16 %v112
    %v384 = vunpack.c.h.b16 %v112
    %v385 = vunpack.c.l.b16 %v113
    %v386 = vunpack.c.h.b16 %v113
    %v387 = vunpack.c.l.b16 %v114
    %v388 = vunpack.c.h.b16 %v114
    %v389 = vunpack.c.l.b16 %v115
    %v390 = vunpack.c.h.b16 %v115
    %v391 = vunpack.c.l.b16 %v116
    %v392 = vunpack.c.h.b16 %v116
    %v393 = vunpack.c.l.b16 %v117
    %v394 = vunpack.c.h.b16 %v117
    %v395 = vunpack.c.l.b16 %v118
    %v396 = vunpack.c.h.b16 %v118
    %v397 = vunpack.c.l.b16 %v119
    %v398 = vunpack.c.h.b16 %v119
    %v399 = vunpack.c.l.b16 %v120
    %v400 = vunpack.c.h.b16 %v120
    %v401 = vunpack.c.l.b16 %v121
    %v402 = vunpack.c.h.b16 %v121
    %v403 = vunpack.c.l.b16 %v122
    %v404 = vunpack.c.h.b16 %v122
    %v405 = vunpack.c.l.b16 %v123
    %v406 = vunpack.c.h.b16 %v123
    %v407 = vunpack.c.l.b16 %v124
    %v408 = vunpack.c.h.b16 %v124
    %v409 = vunpack.c.l.b16 %v125
    %v410 = vunpack.c.h.b16 %v125
    %v411 = vunpack.c.l.b16 %v126
    %v412 = vunpack.c.h.b16 %v126
    %v413 = vunpack.c.l.b16 %v127
    %v414 = vunpack.c.h.b16 %v127
    %v415 = vunpack.c.l.b16 %v128
    %v416 = vunpack.c.h.b16 %v128
    %v417 = vunpack.c.l.b16 %v129
    %v418 = vunpack.c.h.b16 %v129
    %v419 = vunpack.c.l.b16 %v130
    %v420 = vunpack.c.h.b16 %v130
    %v421 = vunpack.c.l.b16 %v131
    %v422 = vunpack.c.h.b16 %v131
    %v423 = vunpack.c.l.b16 %v132
    %v424 = vunpack.c.h.b16 %v132
    %v425 = vunpack.c.l.b16 %v133
    %v426 = vunpack.c.h.b16 %v133
    %v427 = vunpack.c.l.b16 %v134
    %v428 = vunpack.c.h.b16 %v134
    %v429 = vunpack.c.l.b16 %v135
    %v430 = vunpack.c.h.b16 %v135
    %v431 = vunpack.c.l.b16 %v136
    %v432 = vunpack.c.h.b16 %v136
    %v433 = vunpack.c.l.b16 %v137
    %v434 = vunpack.c.h.b16 %v137
    %v435 = vunpack.c.l.b16 %v138
    %v436 = vunpack.c.h.b16 %v138
    %v437 = vunpack.c.l.b16 %v139
    %v438 = vunpack.c.h.b16 %v139
    %v439 = vunpack.c.l.b16 %v140
    %v440 = vunpack.c.h.b16 %v140
    %v441 = vunpack.c.l.b16 %v141
    %v442 = vunpack.c.h.b16 %v141
    %v443 = vunpack.c.l.b16 %v142
    %v444 = vunpack.c.h.b16 %v142
    %v445 = vunpack.c.l.b16 %v143
    %v446 = vunpack.c.h.b16 %v143
    %v447 = vunpack.c.l.b16 %v144
    %v448 = vunpack.c.h.b16 %v144
    %v449 = vunpack.c.l.b16 %v145
    %v450 = vunpack.c.h.b16 %v145
    %v451 = vunpack.c.l.b16 %v146
    %v452 = vunpack.c.h.b16 %v146
    %v453 = vpack.c.b16 %v259, %v257
    %v454 = vpack.c.b16 %v260, %v258
    %v455 = vpack.c.b16 %v263, %v261
    %v456 = vpack.c.b16 %v264, %v262
    %v457 = vpack.c.b16 %v267, %v265
    %v458 = vpack.c.b16 %v268, %v266
    %v459 = vpack.c.b16 %v271, %v269
    %v460 = vpack.c.b16 %v272, %v270
    %v461 = vpack.c.b16 %v275, %v273
    %v462 = vpack.c.b16 %v276, %v274
    %v463 = vpack.c.b16 %v279, %v277
    %v464 = vpack.c.b16 %v280, %v278
    %v465 = vpack.c.b16 %v283, %v281
    %v466 = vpack.c.b16 %v284, %v282
    %v467 = vpack.c.b16 %v287, %v285
    %v468 = vpack.c.b16 %v288, %v286
    %v469 = vpack.c.b16 %v291, %v289
    %v470 = vpack.c.b16 %v292, %v290
    %v471 = vpack.c.b16 %v295, %v293
    %v472 = vpack.c.b16 %v296, %v294
    %v473 = vpack.c.b16 %v299, %v297
    %v474 = vpack.c.b16 %v300, %v298
    %v475 = vpack.c.b16 %v303, %v301
    %v476 = vpack.c.b16 %v304, %v302
    %v477 = vpack.c.b16 %v307, %v305
    %v478 = vpack.c.b16 %v308, %v306
    %v479 = vpack.c.b16 %v311, %v309
    %v480 = vpack.c.b16 %v312, %v310
    %v481 = vpack.c.b16 %v315, %v313
    %v482 = vpack.c.b16 %v316, %v314
    %v483 = vpack.c.b16 %v319, %v317
    %v484 = vpack.c.b16 %v320, %v318
    %v485 = vpack.c.b16 %v323, %v321
    %v486 = vpack.c.b16 %v324, %v322
    %v487 = vpack.c.b16 %v327, %v325
    %v488 = vpack.c.b16 %v328, %v326
    %v489 = vpack.c.b16 %v331, %v329
    %v490 = vpack.c.b16 %v332, %v330
    %v491 = vpack.c.b16 %v335, %v333
    %v492 = vpack.c.b16 %v336, %v334
    %v493 = vpack.c.b16 %v339, %v337
    %v494 = vpack.c.b16 %v340, %v338
    %v495 = vpack.c.b16 %v343, %v341
    %v496 = vpack.c.b16 %v344, %v342
    %v497 = vpack.c.b16 %v347, %v345
    %v498 = vpack.c.b16 %v348, %v346
    %v499 = vpack.c.b16 %v351, %v349
    %v500 = vpack.c.b16 %v352, %v350
    %v501 = vpack.c.b16 %v355, %v353
    %v502 = vpack.c.b16 %v356, %v354
    %v503 = vpack.c.b16 %v359, %v357
    %v504 = vpack.c.b16 %v360, %v358
    %v505 = vpack.c.b16 %v363, %v361
    %v506 = vpack.c.b16 %v364, %v362
    %v507 = vpack.c.b16 %v367, %v365
    %v508 = vpack.c.b16 %v368, %v366
    %v509 = vpack.c.b16 %v371, %v369
    %v510 = vpack.c.b16 %v372, %v370
    %v511 = vpack.c.b16 %v375, %v373
    %v512 = vpack.c.b16 %v376, %v374
    %v513 = vpack.c.b16 %v379, %v377
    %v514 = vpack.c.b16 %v380, %v378
    %v515 = vpack.c.b16 %v383, %v381
    %v516 = vpack.c.b16 %v384, %v382
    %v517 = vpack.c.b16 %v387, %v385
    %v518 = vpack.c.b16 %v388, %v386
    %v519 = vpack.c.b16 %v391, %v389
    %v520 = vpack.c.b16 %v392, %v390
    %v521 = vpack.c.b16 %v395, %v393
    %v522 = vpack.c.b16 %v396, %v394
    %v523 = vpack.c.b16 %v399, %v397
    %v524 = vpack.c.b16 %v400, %v398
    %v525 = vpack.c.b16 %v403, %v401
    %v526 = vpack.c.b16 %v404, %v402
    %v527 = vpack.c.b16 %v407, %v405
    %v528 = vpack.c.b16 %v408, %v406
    %v529 = vpack.c.b16 %v411, %v409
    %v530 = vpack.c.b16 %v412, %v410
    %v531 = vpack.c.b16 %v415, %v413
    %v532 = vpack.c.b16 %v416, %v414
    %v533 = vpack.c.b16 %v419, %v417
    %v534 = vpack.c.b16 %v420, %v418
    %v535 = vpack.c.b16 %v423, %v421
    %v536 = vpack.c.b16 %v424, %v422
    %v537 = vpack.c.b16 %v427, %v425
    %v538 = vpack.c.b16 %v428, %v426
    %v539 = vpack.c.b16 %v431, %v429
    %v540 = vpack.c.b16 %v432, %v430
    %v541 = vpack.c.b16 %v435, %v433
    %v542 = vpack.c.b16 %v436, %v434
    %v543 = vpack.c.b16 %v439, %v437
    %v544 = vpack.c.b16 %v440, %v438
    %v545 = vpack.c.b16 %v443, %v441
    %v546 = vpack.c.b16 %v444, %v442
    %v547 = vpack.c.b16 %v447, %v445
    %v548 = vpack.c.b16 %v448, %v446
    %v549 = vpack.c.b16 %v451, %v449
    %v550 = vpack.c.b16 %v452, %v450
    %vm649 = vcmask 130048
    %v651 = vsel %vm649, %v48, 0
    %653 = vmatprep.subr.bf16.mxu0 %v454
    %654 = vmatpush1.bf16.msra.mxu0 %v453
    %655 = vmatprep.subr.bf16.mxu0 %v456
    %656 = vmatpush1.bf16.msra.mxu0 %v455
    %657 = vmatprep.subr.bf16.mxu0 %v458
    %658 = vmatpush1.bf16.msra.mxu0 %v457
    %659 = vmatprep.subr.bf16.mxu0 %v460
    %660 = vmatpush1.bf16.msra.mxu0 %v459
    %661 = vmatprep.subr.bf16.mxu0 %v462
    %662 = vmatpush1.bf16.msra.mxu0 %v461
    %663 = vmatprep.subr.bf16.mxu0 %v464
    %664 = vmatpush1.bf16.msra.mxu0 %v463
    %665 = vmatprep.subr.bf16.mxu0 %v466
    %666 = vmatpush1.bf16.msra.mxu0 %v465
    %667 = vmatprep.subr.bf16.mxu0 %v468
    %668 = vmatpush1.bf16.msra.mxu0 %v467
    %669 = vmatprep.subr.bf16.mxu0 %v470
    %670 = vmatpush1.bf16.msra.mxu0 %v469
    %671 = vmatprep.subr.bf16.mxu0 %v472
    %672 = vmatpush1.bf16.msra.mxu0 %v471
    %673 = vmatprep.subr.bf16.mxu0 %v474
    %674 = vmatpush1.bf16.msra.mxu0 %v473
    %675 = vmatprep.subr.bf16.mxu0 %v476
    %676 = vmatpush1.bf16.msra.mxu0 %v475
    %677 = vmatprep.subr.bf16.mxu0 %v478
    %678 = vmatpush1.bf16.msra.mxu0 %v477
    %679 = vmatprep.subr.bf16.mxu0 %v480
    %680 = vmatpush1.bf16.msra.mxu0 %v479
    %681 = vmatprep.subr.bf16.mxu0 %v482
    %682 = vmatpush1.bf16.msra.mxu0 %v481
    %683 = vmatprep.subr.bf16.mxu0 %v484
    %684 = vmatpush1.bf16.msra.mxu0 %v483
    %685 = vmatprep.mubr.bf16.mxu0 %v43
    %686 = vmatmul.mubr.bf16.gmra.mrb[0].mxu0 %v42
    %v687 = vpop.f32.mrb[0].mxu0
    %v688 = vadd.f32 %v152, %v687
    %v689 = vpop.f32.mrb[0].mxu0
    %v690 = vadd.f32 %v156, %v689
    %v691 = vpop.f32.mrb[0].mxu0
    %v692 = vadd.f32 %v152, %v691
    %v693 = vpop.f32.mrb[0].mxu0
    %v694 = vadd.f32 %v156, %v693
    %695 = vdwg.mxu0
    %696 = vmatprep.subr.bf16.mxu0 %v486
    %697 = vmatpush1.bf16.msra.mxu0 %v485
    %698 = vmatprep.subr.bf16.mxu0 %v488
    %699 = vmatpush1.bf16.msra.mxu0 %v487
    %700 = vmatprep.subr.bf16.mxu0 %v490
    %701 = vmatpush1.bf16.msra.mxu0 %v489
    %702 = vmatprep.subr.bf16.mxu0 %v492
    %703 = vmatpush1.bf16.msra.mxu0 %v491
    %704 = vmatprep.subr.bf16.mxu0 %v494
    %705 = vmatpush1.bf16.msra.mxu0 %v493
    %706 = vmatprep.subr.bf16.mxu0 %v496
    %707 = vmatpush1.bf16.msra.mxu0 %v495
    %708 = vmatprep.subr.bf16.mxu0 %v498
    %709 = vmatpush1.bf16.msra.mxu0 %v497
    %710 = vmatprep.subr.bf16.mxu0 %v500
    %711 = vmatpush1.bf16.msra.mxu0 %v499
    %712 = vmatprep.subr.bf16.mxu0 %v502
    %713 = vmatpush1.bf16.msra.mxu0 %v501
    %714 = vmatprep.subr.bf16.mxu0 %v504
    %715 = vmatpush1.bf16.msra.mxu0 %v503
    %716 = vmatprep.subr.bf16.mxu0 %v506
    %717 = vmatpush1.bf16.msra.mxu0 %v505
    %718 = vmatprep.subr.bf16.mxu0 %v508
    %719 = vmatpush1.bf16.msra.mxu0 %v507
    %720 = vmatprep.subr.bf16.mxu0 %v510
    %721 = vmatpush1.bf16.msra.mxu0 %v509
    %722 = vmatprep.subr.bf16.mxu0 %v512
    %723 = vmatpush1.bf16.msra.mxu0 %v511
    %724 = vmatprep.subr.bf16.mxu0 %v514
    %725 = vmatpush1.bf16.msra.mxu0 %v513
    %726 = vmatprep.subr.bf16.mxu0 %v516
    %727 = vmatpush1.bf16.msra.mxu0 %v515
    %728 = vmatprep.mubr.bf16.mxu0 %v45
    %729 = vmatmul.mubr.bf16.gmra.mrb[0].mxu0 %v44
    %v730 = vpop.f32.mrb[0].mxu0
    %v731 = vadd.f32 %v688, %v730
    %v732 = vpop.f32.mrb[0].mxu0
    %v733 = vadd.f32 %v690, %v732
    %v734 = vpop.f32.mrb[0].mxu0
    %v735 = vadd.f32 %v692, %v734
    %v736 = vpop.f32.mrb[0].mxu0
    %v737 = vadd.f32 %v694, %v736
    %738 = vdwg.mxu0
    %739 = vmatprep.subr.bf16.mxu0 %v518
    %740 = vmatpush1.bf16.msra.mxu0 %v517
    %741 = vmatprep.subr.bf16.mxu0 %v520
    %742 = vmatpush1.bf16.msra.mxu0 %v519
    %743 = vmatprep.subr.bf16.mxu0 %v522
    %744 = vmatpush1.bf16.msra.mxu0 %v521
    %745 = vmatprep.subr.bf16.mxu0 %v524
    %746 = vmatpush1.bf16.msra.mxu0 %v523
    %747 = vmatprep.subr.bf16.mxu0 %v526
    %748 = vmatpush1.bf16.msra.mxu0 %v525
    %749 = vmatprep.subr.bf16.mxu0 %v528
    %750 = vmatpush1.bf16.msra.mxu0 %v527
    %751 = vmatprep.subr.bf16.mxu0 %v530
    %752 = vmatpush1.bf16.msra.mxu0 %v529
    %753 = vmatprep.subr.bf16.mxu0 %v532
    %754 = vmatpush1.bf16.msra.mxu0 %v531
    %755 = vmatprep.subr.bf16.mxu0 %v534
    %756 = vmatpush1.bf16.msra.mxu0 %v533
    %757 = vmatprep.subr.bf16.mxu0 %v536
    %758 = vmatpush1.bf16.msra.mxu0 %v535
    %759 = vmatprep.subr.bf16.mxu0 %v538
    %760 = vmatpush1.bf16.msra.mxu0 %v537
    %761 = vmatprep.subr.bf16.mxu0 %v540
    %762 = vmatpush1.bf16.msra.mxu0 %v539
    %763 = vmatprep.subr.bf16.mxu0 %v542
    %764 = vmatpush1.bf16.msra.mxu0 %v541
    %765 = vmatprep.subr.bf16.mxu0 %v544
    %766 = vmatpush1.bf16.msra.mxu0 %v543
    %767 = vmatprep.subr.bf16.mxu0 %v546
    %768 = vmatpush1.bf16.msra.mxu0 %v545
    %769 = vmatprep.subr.bf16.mxu0 %v548
    %770 = vmatpush1.bf16.msra.mxu0 %v547
    %771 = vmatprep.mubr.bf16.mxu0 %v47
    %772 = vmatmul.mubr.bf16.gmra.mrb[0].mxu0 %v46
    %v773 = vpop.f32.mrb[0].mxu0
    %v774 = vadd.f32 %v731, %v773
    %v775 = vpop.f32.mrb[0].mxu0
    %v776 = vadd.f32 %v733, %v775
    %v777 = vpop.f32.mrb[0].mxu0
    %v778 = vadd.f32 %v735, %v777
    %v779 = vpop.f32.mrb[0].mxu0
    %v780 = vadd.f32 %v737, %v779
    %781 = vdwg.mxu0
    %782 = vmatprep.subr.bf16.mxu0 %v550
    %783 = vmatpush1.bf16.msra.mxu0 %v549
    %784 = vmatprep.subr.bf16.mxu0 0
    %785 = vmatpush1.bf16.msra.mxu0 0
    %786 = vmatprep.subr.bf16.mxu0 0
    %787 = vmatpush1.bf16.msra.mxu0 0
    %788 = vmatprep.subr.bf16.mxu0 0
    %789 = vmatpush1.bf16.msra.mxu0 0
    %790 = vmatprep.subr.bf16.mxu0 0
    %791 = vmatpush1.bf16.msra.mxu0 0
    %792 = vmatprep.subr.bf16.mxu0 0
    %793 = vmatpush1.bf16.msra.mxu0 0
    %794 = vmatprep.subr.bf16.mxu0 0
    %795 = vmatpush1.bf16.msra.mxu0 0
    %796 = vmatprep.subr.bf16.mxu0 0
    %797 = vmatpush1.bf16.msra.mxu0 0
    %798 = vmatprep.subr.bf16.mxu0 0
    %799 = vmatpush1.bf16.msra.mxu0 0
    %800 = vmatprep.subr.bf16.mxu0 0
    %801 = vmatpush1.bf16.msra.mxu0 0
    %802 = vmatprep.subr.bf16.mxu0 0
    %803 = vmatpush1.bf16.msra.mxu0 0
    %804 = vmatprep.subr.bf16.mxu0 0
    %805 = vmatpush1.bf16.msra.mxu0 0
    %806 = vmatprep.subr.bf16.mxu0 0
    %807 = vmatpush1.bf16.msra.mxu0 0
    %808 = vmatprep.subr.bf16.mxu0 0
    %809 = vmatpush1.bf16.msra.mxu0 0
    %810 = vmatprep.subr.bf16.mxu0 0
    %811 = vmatpush1.bf16.msra.mxu0 0
    %812 = vmatprep.subr.bf16.mxu0 0
    %813 = vmatpush1.bf16.msra.mxu0 0
    %814 = vmatprep.mubr.bf16.mxu0 0
    %815 = vmatmul.mubr.bf16.gmra.mrb[0].mxu0 %v651
    %v816 = vpop.f32.mrb[0].mxu0
    %v817 = vadd.f32 %v774, %v816
    %v818 = vpop.f32.mrb[0].mxu0
    %v819 = vadd.f32 %v776, %v818
    %v820 = vpop.f32.mrb[0].mxu0
    %v821 = vadd.f32 %v778, %v820
    %v822 = vpop.f32.mrb[0].mxu0
    %v823 = vadd.f32 %v780, %v822
    %824 = vdwg.mxu0
    %v825 = vmax.f32 %v817, 0.0
    %v826 = vmax.f32 %v819, 0.0
    %v827 = vmax.f32 %v821, 0.0
    %v828 = vmax.f32 %v823, 0.0
    %v829 = vpack.c.bf16 %v827, %v825
    %v830 = vpack.c.bf16 %v828, %v826
    %v831 = vld [vmem:[%s3] sm:$0xf]
    %v832 = vld [vmem:[%s3 + $0x4] sm:$0xf]
    %v833 = vld [vmem:[%s3 + $0x8] sm:$0xf]
    %v834 = vld [vmem:[%s3 + $0xc] sm:$0xf]
    %v835 = vld [vmem:[%s3 + $0x10] sm:$0xf]
    %v836 = vld [vmem:[%s3 + $0x14] sm:$0xf]
    %v837 = vld [vmem:[%s3 + $0x18] sm:$0xf]
    %v838 = vld [vmem:[%s3 + $0x1c] sm:$0xf]
    %v839 = vld [vmem:[%s3 + $0x20] sm:$0xf]
    %v840 = vld [vmem:[%s3 + $0x24] sm:$0xf]
    %v841 = vld [vmem:[%s3 + $0x28] sm:$0xf]
    %v842 = vld [vmem:[%s3 + $0x2c] sm:$0xf]
    %v843 = vld [vmem:[%s3 + $0x30] sm:$0xf]
    %v844 = vld [vmem:[%s3 + $0x34] sm:$0xf]
    %v845 = vld [vmem:[%s3 + $0x38] sm:$0xf]
    %v846 = vld [vmem:[%s3 + $0x3c] sm:$0xf]
    %v847 = vld [vmem:[%s3 + $0x40] sm:$0xf]
    %v848 = vld [vmem:[%s3 + $0x44] sm:$0xf]
    %v849 = vld [vmem:[%s3 + $0x48] sm:$0xf]
    %v850 = vld [vmem:[%s3 + $0x4c] sm:$0xf]
    %v851 = vld [vmem:[%s3 + $0x50] sm:$0xf]
    %v852 = vld [vmem:[%s3 + $0x54] sm:$0xf]
    %v853 = vld [vmem:[%s3 + $0x58] sm:$0xf]
    %v854 = vld [vmem:[%s3 + $0x5c] sm:$0xf]
    %v855 = vld [vmem:[%s3 + $0x60] sm:$0xf]
    %v856 = vld [vmem:[%s3 + $0x64] sm:$0xf]
    %v857 = vld [vmem:[%s3 + $0x68] sm:$0xf]
    %v858 = vld [vmem:[%s3 + $0x6c] sm:$0xf]
    %v859 = vld [vmem:[%s3 + $0x70] sm:$0xf]
    %v860 = vld [vmem:[%s3 + $0x74] sm:$0xf]
    %v861 = vld [vmem:[%s3 + $0x78] sm:$0xf]
    %v862 = vld [vmem:[%s3 + $0x7c] sm:$0xf]
    %v863 = vld [vmem:[%s4] sm:$0x1]
    %v865 = vlaneseq
    %v866 = vshrl.u32 %v865, 7
    %v867 = vsub.s32 0, %v866
    %v868 = vrot.slane %v863, %v867
    %v902 = vunpack.c.l.b16 %v831
    %v903 = vunpack.c.l.b16 %v832
    %v904 = vunpack.c.l.b16 %v833
    %v905 = vunpack.c.l.b16 %v834
    %v906 = vunpack.c.l.b16 %v835
    %v907 = vunpack.c.l.b16 %v836
    %v908 = vunpack.c.l.b16 %v837
    %v909 = vunpack.c.l.b16 %v838
    %v910 = vunpack.c.l.b16 %v839
    %v911 = vunpack.c.l.b16 %v840
    %v912 = vunpack.c.l.b16 %v841
    %v913 = vunpack.c.l.b16 %v842
    %v914 = vunpack.c.l.b16 %v843
    %v915 = vunpack.c.l.b16 %v844
    %v916 = vunpack.c.l.b16 %v845
    %v917 = vunpack.c.l.b16 %v846
    %v918 = vunpack.c.l.b16 %v847
    %v919 = vunpack.c.l.b16 %v848
    %v920 = vunpack.c.l.b16 %v849
    %v921 = vunpack.c.l.b16 %v850
    %v922 = vunpack.c.l.b16 %v851
    %v923 = vunpack.c.l.b16 %v852
    %v924 = vunpack.c.l.b16 %v853
    %v925 = vunpack.c.l.b16 %v854
    %v926 = vunpack.c.l.b16 %v855
    %v927 = vunpack.c.l.b16 %v856
    %v928 = vunpack.c.l.b16 %v857
    %v929 = vunpack.c.l.b16 %v858
    %v930 = vunpack.c.l.b16 %v859
    %v931 = vunpack.c.l.b16 %v860
    %v932 = vunpack.c.l.b16 %v861
    %v933 = vunpack.c.l.b16 %v862
    %v934 = vpack.c.b16 %v903, %v902
    %v935 = vpack.c.b16 %v905, %v904
    %v936 = vpack.c.b16 %v907, %v906
    %v937 = vpack.c.b16 %v909, %v908
    %v938 = vpack.c.b16 %v911, %v910
    %v939 = vpack.c.b16 %v913, %v912
    %v940 = vpack.c.b16 %v915, %v914
    %v941 = vpack.c.b16 %v917, %v916
    %v942 = vpack.c.b16 %v919, %v918
    %v943 = vpack.c.b16 %v921, %v920
    %v944 = vpack.c.b16 %v923, %v922
    %v945 = vpack.c.b16 %v925, %v924
    %v946 = vpack.c.b16 %v927, %v926
    %v947 = vpack.c.b16 %v929, %v928
    %v948 = vpack.c.b16 %v931, %v930
    %v949 = vpack.c.b16 %v933, %v932
    %966 = vmatprep.subr.bf16.mxu0 0
    %967 = vmatpush1.bf16.msra.mxu0 %v934
    %968 = vmatprep.subr.bf16.mxu0 0
    %969 = vmatpush1.bf16.msra.mxu0 %v935
    %970 = vmatprep.subr.bf16.mxu0 0
    %971 = vmatpush1.bf16.msra.mxu0 %v936
    %972 = vmatprep.subr.bf16.mxu0 0
    %973 = vmatpush1.bf16.msra.mxu0 %v937
    %974 = vmatprep.subr.bf16.mxu0 0
    %975 = vmatpush1.bf16.msra.mxu0 %v938
    %976 = vmatprep.subr.bf16.mxu0 0
    %977 = vmatpush1.bf16.msra.mxu0 %v939
    %978 = vmatprep.subr.bf16.mxu0 0
    %979 = vmatpush1.bf16.msra.mxu0 %v940
    %980 = vmatprep.subr.bf16.mxu0 0
    %981 = vmatpush1.bf16.msra.mxu0 %v941
    %982 = vmatprep.subr.bf16.mxu0 0
    %983 = vmatpush1.bf16.msra.mxu0 %v942
    %984 = vmatprep.subr.bf16.mxu0 0
    %985 = vmatpush1.bf16.msra.mxu0 %v943
    %986 = vmatprep.subr.bf16.mxu0 0
    %987 = vmatpush1.bf16.msra.mxu0 %v944
    %988 = vmatprep.subr.bf16.mxu0 0
    %989 = vmatpush1.bf16.msra.mxu0 %v945
    %990 = vmatprep.subr.bf16.mxu0 0
    %991 = vmatpush1.bf16.msra.mxu0 %v946
    %992 = vmatprep.subr.bf16.mxu0 0
    %993 = vmatpush1.bf16.msra.mxu0 %v947
    %994 = vmatprep.subr.bf16.mxu0 0
    %995 = vmatpush1.bf16.msra.mxu0 %v948
    %996 = vmatprep.subr.bf16.mxu0 0
    %997 = vmatpush1.bf16.msra.mxu0 %v949
    %998 = vmatprep.mubr.bf16.mxu0 %v830
    %999 = vmatmul.mubr.bf16.gmra.mrb[0].mxu0 %v829
    %v1000 = vpop.f32.mrb[0].mxu0
    %v1001 = vadd.f32 %v868, %v1000
    %v1002 = vpop.f32.mrb[0].mxu0
    %v1003 = vpop.f32.mrb[0].mxu0
    %v1004 = vadd.f32 %v868, %v1003
    %v1005 = vpop.f32.mrb[0].mxu0
    %1006 = vdwg.mxu0
    %v1007 = vmax.f32 %v1001, 0.0
    %v1008 = vmax.f32 %v1004, 0.0
    %v1009 = vpack.c.bf16 %v1008, %v1007
    %v1010 = vld [vmem:[%s5] sm:$0xf]
    %v1011 = vld [vmem:[%s5 + $0x4] sm:$0xf]
    %v1012 = vld [vmem:[%s5 + $0x8] sm:$0xf]
    %v1013 = vld [vmem:[%s5 + $0xc] sm:$0xf]
    %v1014 = vld [vmem:[%s5 + $0x10] sm:$0xf]
    %v1015 = vld [vmem:[%s5 + $0x14] sm:$0xf]
    %v1016 = vld [vmem:[%s5 + $0x18] sm:$0xf]
    %v1017 = vld [vmem:[%s5 + $0x1c] sm:$0xf]
    %v1018 = vld [vmem:[%s5 + $0x20] sm:$0xf]
    %v1019 = vld [vmem:[%s5 + $0x24] sm:$0xf]
    %v1020 = vld [vmem:[%s5 + $0x28] sm:$0xf]
    %v1021 = vld [vmem:[%s5 + $0x2c] sm:$0xf]
    %v1022 = vld [vmem:[%s5 + $0x30] sm:$0xf]
    %v1023 = vld [vmem:[%s5 + $0x34] sm:$0xf]
    %v1024 = vld [vmem:[%s5 + $0x38] sm:$0xf]
    %v1025 = vld [vmem:[%s5 + $0x3c] sm:$0xf]
    %v1026 = vld [vmem:[%s6] sm:$0x1]
    %v1028 = vlaneseq
    %v1029 = vshrl.u32 %v1028, 7
    %v1030 = vsub.s32 0, %v1029
    %v1031 = vrot.slane %v1026, %v1030
    %v1049 = vunpack.c.l.b16 %v1010
    %v1050 = vunpack.c.l.b16 %v1011
    %v1051 = vunpack.c.l.b16 %v1012
    %v1052 = vunpack.c.l.b16 %v1013
    %v1053 = vunpack.c.l.b16 %v1014
    %v1054 = vunpack.c.l.b16 %v1015
    %v1055 = vunpack.c.l.b16 %v1016
    %v1056 = vunpack.c.l.b16 %v1017
    %v1057 = vunpack.c.l.b16 %v1018
    %v1058 = vunpack.c.l.b16 %v1019
    %v1059 = vunpack.c.l.b16 %v1020
    %v1060 = vunpack.c.l.b16 %v1021
    %v1061 = vunpack.c.l.b16 %v1022
    %v1062 = vunpack.c.l.b16 %v1023
    %v1063 = vunpack.c.l.b16 %v1024
    %v1064 = vunpack.c.l.b16 %v1025
    %v1065 = vpack.c.b16 %v1050, %v1049
    %v1066 = vpack.c.b16 %v1052, %v1051
    %v1067 = vpack.c.b16 %v1054, %v1053
    %v1068 = vpack.c.b16 %v1056, %v1055
    %v1069 = vpack.c.b16 %v1058, %v1057
    %v1070 = vpack.c.b16 %v1060, %v1059
    %v1071 = vpack.c.b16 %v1062, %v1061
    %v1072 = vpack.c.b16 %v1064, %v1063
    %1081 = vmatprep.subr.bf16.mxu0 0
    %1082 = vmatpush1.bf16.msra.mxu0 %v1065
    %1083 = vmatprep.subr.bf16.mxu0 0
    %1084 = vmatpush1.bf16.msra.mxu0 %v1066
    %1085 = vmatprep.subr.bf16.mxu0 0
    %1086 = vmatpush1.bf16.msra.mxu0 %v1067
    %1087 = vmatprep.subr.bf16.mxu0 0
    %1088 = vmatpush1.bf16.msra.mxu0 %v1068
    %1089 = vmatprep.subr.bf16.mxu0 0
    %1090 = vmatpush1.bf16.msra.mxu0 %v1069
    %1091 = vmatprep.subr.bf16.mxu0 0
    %1092 = vmatpush1.bf16.msra.mxu0 %v1070
    %1093 = vmatprep.subr.bf16.mxu0 0
    %1094 = vmatpush1.bf16.msra.mxu0 %v1071
    %1095 = vmatprep.subr.bf16.mxu0 0
    %1096 = vmatpush1.bf16.msra.mxu0 %v1072
    %1097 = vmatprep.subr.bf16.mxu0 0
    %1098 = vmatpush1.bf16.msra.mxu0 0
    %1099 = vmatprep.subr.bf16.mxu0 0
    %1100 = vmatpush1.bf16.msra.mxu0 0
    %1101 = vmatprep.subr.bf16.mxu0 0
    %1102 = vmatpush1.bf16.msra.mxu0 0
    %1103 = vmatprep.subr.bf16.mxu0 0
    %1104 = vmatpush1.bf16.msra.mxu0 0
    %1105 = vmatprep.subr.bf16.mxu0 0
    %1106 = vmatpush1.bf16.msra.mxu0 0
    %1107 = vmatprep.subr.bf16.mxu0 0
    %1108 = vmatpush1.bf16.msra.mxu0 0
    %1109 = vmatprep.subr.bf16.mxu0 0
    %1110 = vmatpush1.bf16.msra.mxu0 0
    %1111 = vmatprep.subr.bf16.mxu0 0
    %1112 = vmatpush1.bf16.msra.mxu0 0
    %1113 = vmatprep.mubr.bf16.mxu0 0
    %1114 = vmatmul.mubr.bf16.gmra.mrb[0].mxu0 %v1009
    %v1115 = vpop.f32.mrb[0].mxu0
    %v1116 = vadd.f32 %v1031, %v1115
    %v1117 = vpop.f32.mrb[0].mxu0
    %v1118 = vpop.f32.mrb[0].mxu0
    %v1119 = vadd.f32 %v1031, %v1118
    %v1120 = vpop.f32.mrb[0].mxu0
    %1121 = vdwg.mxu0
    %1122 = vst [vmem:[#allocation2] sm:$0xff] %v1116
    %1123 = vst [vmem:[#allocation2 + $0x8] sm:$0xff] %v1119
    // Predicated region
    $region30: #{_lambda_.1} parent=1 // pred_check
      _
    $region31: #{_lambda_.1} parent=1 // pred_check_branch
      %1125 = sbr.rel (0) target = $region33
    $region32: #{_lambda_.1} parent=1 // pred_region
      %s1127 = ssub.s32 256, 256
      %1128 = vsyncadd [#allocation3], %s1127
      %s1129 = sshll.u32 [#allocation2], 4
      %s1130 = int_to_ptr.vmem [resolvable:$true] %s1129
      %1135 = dma.vmem_to_hbm [thread:$0]  %s1130, 256, %s7, [#allocation3], 128, 128, 8
    $region33: #{_lambda_.1} parent=1 // pred_fallthru
      _
    // Predicated region
    $region34: #{_lambda_.1} parent=1 // pred_check
      _
    $region35: #{_lambda_.1} parent=1 // pred_check_branch
      %1137 = sbr.rel (0) target = $region37
    $region36: #{_lambda_.1} parent=1 // pred_region
      %1138 = dma.done [#allocation3], 256
    $region37: #{_lambda_.1} parent=1 // pred_fallthru
      _
    %1139 = vsyncpa [#allocation3], 1

</llo_original>
